<compile_context>
chip_gen: v6e
topology: v6e:2x2x1
jax: 0.10.0
libtpu: 0.0.40
codegen_flags: <defaults>
</compile_context>

<pallas_src>
import functools

import jax
import jax.numpy as jnp
from jax.experimental import pallas as pl
from jax.experimental.pallas import tpu as pltpu


def layernorm_kernel(x_ref, w_ref, b_ref, o_ref, *, eps, inv_d, d_real):
    # x_ref: (row_tile, d_pad); w_ref/b_ref: (1, d_pad); o_ref: (row_tile, d_pad)
    x = x_ref[...].astype(jnp.float32)
    # Padded lanes of x are zeros (wrapper pads with 0), so sum(x) over the
    # padded width is already the sum over the real d_model lanes.
    mean = jnp.sum(x, axis=-1, keepdims=True) * inv_d
    centered = x - mean

    d_pad = x_ref.shape[-1]
    if d_pad != d_real:
        # Zero padded lanes so they don't contaminate the variance sum.
        lane = jax.lax.broadcasted_iota(jnp.int32, (1, d_pad), 1)
        centered = jnp.where(lane < d_real, centered, 0.0)

    var = jnp.sum(centered * centered, axis=-1, keepdims=True) * inv_d  # unbiased=False
    inv_std = jax.lax.rsqrt(var + eps)                                  # EUP path

    # Hoisted single (1, d_pad) f32 casts; broadcast against (row_tile, d_pad).
    w_f = w_ref[...].astype(jnp.float32)
    b_f = b_ref[...].astype(jnp.float32)
    o_ref[...] = (centered * inv_std * w_f + b_f).astype(o_ref.dtype)
    # NOTE: padded tail ROWS (grid uses pl.cdiv) may compute on undefined data;
    # safe because the reduction is strictly per-row and out-of-range stores
    # are masked by Pallas. Do not add cross-row reductions without masking.


def _round_up(x, m):
    return ((x + m - 1) // m) * m


def _vmem_capacity_bytes():
    """Physical VMEM per TensorCore; conservative fallback = v7x (64 MiB)."""
    try:
        info = pltpu.get_tpu_info()
        cap = getattr(info, "vmem_capacity_bytes", None)
        if cap:
            return int(cap)
    except Exception:
        pass
    return 64 << 20


def layernorm(x, w, b, *, eps=1e-5, row_tile=None, core_parallel=False):
    batch, seq_len, d_model = x.shape
    rows = batch * seq_len
    itemsize = x.dtype.itemsize

    # Lane-dense layout: pad d_model up to a multiple of 128 so output stores
    # are full vst (no masked partial stores); slice the pad off afterwards.
    d_pad = max(128, _round_up(d_model, 128))
    x2 = x.reshape(rows, d_model)
    w2 = w.reshape(1, d_model)
    b2 = b.reshape(1, d_model)
    if d_pad != d_model:
        x2 = jnp.pad(x2, ((0, 0), (0, d_pad - d_model)))
        w2 = jnp.pad(w2, ((0, 0), (0, d_pad - d_model)), constant_values=1.0)
        b2 = jnp.pad(b2, ((0, 0), (0, d_pad - d_model)))

    # Sublane granularity: 8 rows (4-byte), 16 (2-byte), 32 (1-byte) dtypes.
    sub = {4: 8, 2: 16, 1: 32}.get(itemsize, 8)

    # Generation-aware VMEM accounting.
    vmem_cap = _vmem_capacity_bytes()
    vmem_limit_bytes = (vmem_cap * 3) // 4          # headroom for compiler scratch
    if row_tile is None:
        # Footprint per row of tile:
        #   2x double-buffered input block + 2x double-buffered output block
        #   (input dtype) + ~3 full (row_tile, d_pad) f32 temporaries
        #   (x_f32 / centered / pre-cast result).
        bytes_per_row = d_pad * (4 * itemsize + 3 * 4)
        footprint_budget = vmem_limit_bytes // 2    # keep well inside the limit
        row_tile = footprint_budget // max(1, bytes_per_row)
        row_tile = max(sub, min(row_tile, 8192))    # cap by bytes, not 1024 rows
    # Clamp to the actual row count (rounded up) and to sublane multiples.
    row_tile = max(sub, min(row_tile, _round_up(rows, sub)))
    row_tile = _round_up(row_tile, sub)

    grid = (pl.cdiv(rows, row_tile),)

    # TODO(synk): on v7x verify in a profile that the row axis is split across
    # both TensorCores; if not, pass core_parallel=True (pltpu.CORE_PARALLEL).
    row_semantics = pltpu.CORE_PARALLEL if core_parallel else "parallel"

    cost = pl.CostEstimate(
        flops=6 * rows * d_pad,
        transcendentals=rows,
        bytes_accessed=2 * rows * d_pad * itemsize + 2 * d_pad * itemsize,
    )

    out = pl.pallas_call(
        functools.partial(
            layernorm_kernel, eps=eps, inv_d=1.0 / d_model, d_real=d_model
        ),
        out_shape=jax.ShapeDtypeStruct((rows, d_pad), x.dtype),
        grid_spec=pltpu.PrefetchScalarGridSpec(
            num_scalar_prefetch=0,
            grid=grid,
            in_specs=[
                pl.BlockSpec((row_tile, d_pad), lambda i: (i, 0)),
                pl.BlockSpec((1, d_pad), lambda i: (0, 0)),
                pl.BlockSpec((1, d_pad), lambda i: (0, 0)),
            ],
            out_specs=pl.BlockSpec((row_tile, d_pad), lambda i: (i, 0)),
        ),
        compiler_params=pltpu.CompilerParams(
            dimension_semantics=(row_semantics,),
            vmem_limit_bytes=vmem_limit_bytes,
        ),
        cost_estimate=cost,
    )(x2, w2, b2)

    if d_pad != d_model:
        out = out[:, :d_model]
    return out.reshape(batch, seq_len, d_model)


if __name__ == "__main__":
    # Config implied by module: d_model, layer_norm_eps
    batch, seq_len, d_model = 2, 8, 32
    eps = 1e-5

    key = jax.random.PRNGKey(0)
    x = jax.random.normal(key, (batch, seq_len, d_model), dtype=jnp.float32)

    # Deterministic parameter init matching nn.Parameter(torch.ones/zeros(d_model))
    w = jnp.ones((d_model,), dtype=jnp.float32)
    b = jnp.zeros((d_model,), dtype=jnp.float32)

    out = layernorm(x, w, b, eps=eps)
    jax.block_until_ready(out)

    # Reference check in plain JAX (same semantics as the PyTorch forward).
    mean = jnp.mean(x, axis=-1, keepdims=True)
    var = jnp.mean((x - mean) ** 2, axis=-1, keepdims=True)  # unbiased=False
    ref = (x - mean) / jnp.sqrt(var + eps) * w + b
    assert jnp.allclose(out, ref, atol=1e-5, rtol=1e-5), "mismatch vs reference"

    # TODO(synk): Ckpt() activation-caching hooks have no Pallas equivalent; omitted.
    print("KERNEL_OK")
</pallas_src>

<mosaic_0001>
module attributes {stable_mosaic.version = 11 : i64} {
  func.func @layernorm_kernel(%arg0: i32, %arg1: memref<16x128xf32, #tpu.memory_space<vmem>>, %arg2: memref<1x128xf32, #tpu.memory_space<vmem>>, %arg3: memref<1x128xf32, #tpu.memory_space<vmem>>, %arg4: memref<16x128xf32, #tpu.memory_space<vmem>>) attributes {dimension_semantics = [#tpu.dimension_semantics<parallel>], iteration_bounds = array<i64: 1>, scalar_prefetch = 0 : i64, scratch_operands = 0 : i64, tpu.core_type = #tpu.core_type<tc>, window_params = [{transform_indices = @transform_0, window_bounds = array<i64: 16, 128>}, {pipeline_mode = #tpu.pipeline_mode<synchronous>, transform_indices = @transform_1, window_bounds = array<i64: 1, 128>}, {pipeline_mode = #tpu.pipeline_mode<synchronous>, transform_indices = @transform_2, window_bounds = array<i64: 1, 128>}, {transform_indices = @transform_3, window_bounds = array<i64: 16, 128>}]} {
    %c0 = arith.constant 0 : index
    %c0_0 = arith.constant 0 : index
    %0 = vector.load %arg1[%c0, %c0_0] : memref<16x128xf32, #tpu.memory_space<vmem>>, vector<16x128xf32>
    %cst = arith.constant dense<0.000000e+00> : vector<16xf32>
    %1 = vector.multi_reduction <add>, %0, %cst [1] : vector<16x128xf32> to vector<16xf32>
    %2 = vector.shape_cast %1 : vector<16xf32> to vector<16x1xf32>
    %cst_1 = arith.constant 3.125000e-02 : f32
    %3 = vector.broadcast %cst_1 : f32 to vector<16x1xf32>
    %4 = arith.mulf %2, %3 : vector<16x1xf32>
    %5 = vector.broadcast %4 : vector<16x1xf32> to vector<16x128xf32>
    %6 = arith.subf %0, %5 : vector<16x128xf32>
    %7 = tpu.iota {dimensions = array<i32: 1>} : vector<1x128xi32>
    %c32_i32 = arith.constant 32 : i32
    %8 = vector.broadcast %c32_i32 : i32 to vector<1x128xi32>
    %9 = arith.cmpi slt, %7, %8 : vector<1x128xi32>
    %cst_2 = arith.constant 0.000000e+00 : f32
    %10 = vector.shape_cast %9 : vector<1x128xi1> to vector<1x128xi1>
    %11 = vector.broadcast %10 : vector<1x128xi1> to vector<16x128xi1>
    %12 = vector.broadcast %cst_2 : f32 to vector<16x128xf32>
    %13 = arith.select %11, %6, %12 : vector<16x128xi1>, vector<16x128xf32>
    %14 = arith.mulf %13, %13 : vector<16x128xf32>
    %cst_3 = arith.constant dense<0.000000e+00> : vector<16xf32>
    %15 = vector.multi_reduction <add>, %14, %cst_3 [1] : vector<16x128xf32> to vector<16xf32>
    %16 = vector.shape_cast %15 : vector<16xf32> to vector<16x1xf32>
    %cst_4 = arith.constant 3.125000e-02 : f32
    %17 = vector.broadcast %cst_4 : f32 to vector<16x1xf32>
    %18 = arith.mulf %16, %17 : vector<16x1xf32>
    %cst_5 = arith.constant 9.99999974E-6 : f32
    %19 = vector.broadcast %cst_5 : f32 to vector<16x1xf32>
    %20 = arith.addf %18, %19 : vector<16x1xf32>
    %21 = math.rsqrt %20 : vector<16x1xf32>
    %c0_6 = arith.constant 0 : index
    %c0_7 = arith.constant 0 : index
    %22 = vector.load %arg2[%c0_6, %c0_7] : memref<1x128xf32, #tpu.memory_space<vmem>>, vector<1x128xf32>
    %c0_8 = arith.constant 0 : index
    %c0_9 = arith.constant 0 : index
    %23 = vector.load %arg3[%c0_8, %c0_9] : memref<1x128xf32, #tpu.memory_space<vmem>>, vector<1x128xf32>
    %24 = vector.broadcast %21 : vector<16x1xf32> to vector<16x128xf32>
    %25 = arith.mulf %13, %24 : vector<16x128xf32>
    %26 = vector.broadcast %22 : vector<1x128xf32> to vector<16x128xf32>
    %27 = arith.mulf %25, %26 : vector<16x128xf32>
    %28 = vector.broadcast %23 : vector<1x128xf32> to vector<16x128xf32>
    %29 = arith.addf %27, %28 : vector<16x128xf32>
    %c0_10 = arith.constant 0 : index
    %c0_11 = arith.constant 0 : index
    %30 = vector.load %arg4[%c0_10, %c0_11] : memref<16x128xf32, #tpu.memory_space<vmem>>, vector<16x128xf32>
    tpu.vector_store %arg4[%c0_10, %c0_11], %29 {strides = array<i32>} : memref<16x128xf32, #tpu.memory_space<vmem>>, vector<16x128xf32>,
    return
  }
  func.func @transform_0(%arg0: i32) -> (i32, i32) {
    %c0_i32 = arith.constant 0 : i32
    %c0_i32_0 = arith.constant 0 : i32
    return %arg0, %c0_i32 : i32, i32
  }
  func.func @transform_1(%arg0: i32) -> (i32, i32) {
    %c0_i32 = arith.constant 0 : i32
    %c0_i32_0 = arith.constant 0 : i32
    %c0_i32_1 = arith.constant 0 : i32
    return %c0_i32, %c0_i32_0 : i32, i32
  }
  func.func @transform_2(%arg0: i32) -> (i32, i32) {
    %c0_i32 = arith.constant 0 : i32
    %c0_i32_0 = arith.constant 0 : i32
    %c0_i32_1 = arith.constant 0 : i32
    return %c0_i32, %c0_i32_0 : i32, i32
  }
  func.func @transform_3(%arg0: i32) -> (i32, i32) {
    %c0_i32 = arith.constant 0 : i32
    %c0_i32_0 = arith.constant 0 : i32
    return %arg0, %c0_i32 : i32, i32
  }
}

</mosaic_0001>

<llo_original>
// kernel: tpu_custom_call.1
$region0: #{tpu_custom_call.1}
  #allocation0 [shape = 'u32[]', space=smem, size = 0x4, offset = 0x4, fixed_abs, tag = 'smem constant byte address 0x4 - core index']
  #allocation1 [shape = 'u32[144,128]{1,0:T(1,128)}', space=vmem, size = 0x12000, scoped, tag = 'internal scratch']
  %s0 = inlined_call_operand.hbm [shape: f32[16,128], index: 0, kind: input, shape index: {}]
  %s1 = inlined_call_operand.vmem [shape: f32[1,128], index: 1, kind: input, shape index: {}]
  %s2 = inlined_call_operand.vmem [shape: f32[1,128], index: 2, kind: input, shape index: {}]
  %s3 = inlined_call_operand.hbm [shape: f32[16,128], index: 3, kind: output, shape index: {}]
  %s4 = sld [smem:[#allocation0]]
  $region26: #{tpu_custom_call.1} parent=0
    _
  %s6 = ssub.s32 1, %s4
  %s7 = scalar_select 0, %s6, %s4
  $region1: #{tpu_custom_call.1} parent=0
    #allocation2 [shape = 'u8[8192]{0}', space=vmem, size = 0x2000, scoped, tag = 'input window, operand 0, single buffered']
    #allocation3 [shape = 's32[1]{0}', space=sflag, size = 0x4, scoped, tag = 'scoped memory for tpu_custom_call.1']
    #allocation4 [shape = 's32[1]{0}', space=sflag, size = 0x4, scoped, tag = 'scoped memory for tpu_custom_call.1']
    #allocation5 [shape = 'u8[8192]{0}', space=vmem, size = 0x2000, scoped, tag = 'output window, operand 0, single buffered']
    %8 = vsyncpa [#allocation3], 0
    %9 = vsyncpa [#allocation4], 0
    // Predicated region
    $region2: #{tpu_custom_call.1} parent=1 // pred_check
      _
    $region3: #{tpu_custom_call.1} parent=1 // pred_check_branch
      %11 = sbr.rel (0) target = $region5
    $region4: #{tpu_custom_call.1} parent=1 // pred_region
      %s13 = ssub.s32 256, 256
      %14 = vsyncadd [#allocation3], %s13
      %s15 = sshll.u32 [#allocation2], 4
      %s16 = int_to_ptr.vmem [resolvable:$true] %s15
      %21 = dma.hbm_to_vmem [thread:$0]  %s0, 256, %s16, [#allocation3], 128, 128, 8
    $region5: #{tpu_custom_call.1} parent=1 // pred_fallthru
      _
    // Predicated region
    $region6: #{tpu_custom_call.1} parent=1 // pred_check
      _
    $region7: #{tpu_custom_call.1} parent=1 // pred_check_branch
      %23 = sbr.rel (0) target = $region9
    $region8: #{tpu_custom_call.1} parent=1 // pred_region
      _
    $region9: #{tpu_custom_call.1} parent=1 // pred_fallthru
      _
    // Predicated region
    $region10: #{tpu_custom_call.1} parent=1 // pred_check
      _
    $region11: #{tpu_custom_call.1} parent=1 // pred_check_branch
      %25 = sbr.rel (0) target = $region13
    $region12: #{tpu_custom_call.1} parent=1 // pred_region
      _
    $region13: #{tpu_custom_call.1} parent=1 // pred_fallthru
      _
    // Predicated region
    $region14: #{tpu_custom_call.1} parent=1 // pred_check
      _
    $region15: #{tpu_custom_call.1} parent=1 // pred_check_branch
      %27 = sbr.rel (0) target = $region17
    $region16: #{tpu_custom_call.1} parent=1 // pred_region
      %28 = dma.done [#allocation3], 256
    $region17: #{tpu_custom_call.1} parent=1 // pred_fallthru
      _
    %v29 = vld [vmem:[#allocation2] sm:$0xff]
    %v30 = vld [vmem:[#allocation2 + $0x8] sm:$0xff]
    %31 = vadd.xlane.f32.xlu0 %v29
    %v32 = vpop.xlane.xlu0 %31
    %33 = vadd.xlane.f32.xlu0 %v30
    %v34 = vpop.xlane.xlu0 %33
    %v35 = vmul.f32 %v32, 0.03125
    %v36 = vmul.f32 %v34, 0.03125
    %v37 = vsub.f32 %v29, %v35
    %v38 = vsub.f32 %v30, %v36
    %v39 = vlaneseq
    %v40 = vand.u32 %v39, 127
    %vm41 = vcmp.lt.s32.totalorder %v40, 32
    %v42 = vsel %vm41, 1, 0
    %vm43 = vcmp.eq.s32.totalorder %v42, 1
    %v44 = vsel %vm43, %v37, 0.0
    %v45 = vsel %vm43, %v38, 0.0
    %v46 = vmul.f32 %v44, %v44
    %v47 = vmul.f32 %v45, %v45
    %48 = vadd.xlane.f32.xlu0 %v46
    %v49 = vpop.xlane.xlu0 %48
    %50 = vadd.xlane.f32.xlu0 %v47
    %v51 = vpop.xlane.xlu0 %50
    %v52 = vmul.f32 %v49, 0.03125
    %v53 = vmul.f32 %v51, 0.03125
    %v54 = vadd.f32 %v52, 1e-05
    %v55 = vadd.f32 %v53, 1e-05
    %v56 = vrsqrt.pop %v54
    %v57 = vrsqrt.pop %v55
    %v58 = vld [vmem:[%s1] sm:$0x1]
    %v59 = vld [vmem:[%s2] sm:$0x1]
    %v60 = vmul.f32 %v44, %v56
    %v61 = vmul.f32 %v45, %v57
    %v63 = vlaneseq
    %v64 = vshrl.u32 %v63, 7
    %v65 = vsub.s32 0, %v64
    %v66 = vrot.slane %v58, %v65
    %v68 = vmul.f32 %v60, %v66
    %v69 = vmul.f32 %v61, %v66
    %v71 = vlaneseq
    %v72 = vshrl.u32 %v71, 7
    %v73 = vsub.s32 0, %v72
    %v74 = vrot.slane %v59, %v73
    %v76 = vadd.f32 %v68, %v74
    %v77 = vadd.f32 %v69, %v74
    %78 = vst [vmem:[#allocation5] sm:$0xff] %v76
    %79 = vst [vmem:[#allocation5 + $0x8] sm:$0xff] %v77
    // Predicated region
    $region18: #{tpu_custom_call.1} parent=1 // pred_check
      _
    $region19: #{tpu_custom_call.1} parent=1 // pred_check_branch
      %81 = sbr.rel (0) target = $region21
    $region20: #{tpu_custom_call.1} parent=1 // pred_region
      %s83 = ssub.s32 256, 256
      %84 = vsyncadd [#allocation4], %s83
      %s85 = sshll.u32 [#allocation5], 4
      %s86 = int_to_ptr.vmem [resolvable:$true] %s85
      %91 = dma.vmem_to_hbm [thread:$0]  %s86, 256, %s3, [#allocation4], 128, 128, 8
    $region21: #{tpu_custom_call.1} parent=1 // pred_fallthru
      _
    // Predicated region
    $region22: #{tpu_custom_call.1} parent=1 // pred_check
      _
    $region23: #{tpu_custom_call.1} parent=1 // pred_check_branch
      %93 = sbr.rel (0) target = $region25
    $region24: #{tpu_custom_call.1} parent=1 // pred_region
      %94 = dma.done [#allocation4], 256
    $region25: #{tpu_custom_call.1} parent=1 // pred_fallthru
      _
    %95 = vsyncpa [#allocation3], 1
    %96 = vsyncpa [#allocation4], 1

</llo_original>
